<compile_context>
chip_gen: v5e
topology: v5e:2x2
jax: 0.10.0
libtpu: 0.0.40
codegen_flags: <defaults>
</compile_context>

<pallas_src>
import functools

import jax
import jax.numpy as jnp
from jax.experimental import pallas as pl
from jax.experimental.pallas import tpu as pltpu


def _const_block_kernel(x_ref, w_ref, b_ref, o_ref, p_ref, *, cin, wp, tile):
    """One (batch, row-tile) grid step.

    x_ref : (1, 1, cin, win)    halo'd, flattened (padded-width) input row tile
    w_ref : (cout, 9*cin)       conv taps with eval-BN scale folded in
    b_ref : (cout, 1)           folded eval-BN bias (f32)
    o_ref : (1, 1, cout, tile)  output slab, spatial (rows*Wp) on the lane axis
    p_ref : (9*cin, tile)       VMEM scratch: fused im2col patch matrix
    """
    # Build the K = 9*cin patch matrix.  Each 3x3 tap is a *contiguous* window of the
    # flattened padded row tile (offset dy*Wp + dx): nine plain lane-window copies,
    # no strided (dx:dx+W) gathers and no reshapes.
    for t in range(9):
        dy, dx = divmod(t, 3)
        off = dy * wp + dx
        p_ref[t * cin:(t + 1) * cin, :] = x_ref[0, 0, :, off:off + tile]

    # Single fused MXU matmul: (cout, 9*cin) @ (9*cin, tile) -> (cout, tile).
    acc = jnp.dot(w_ref[...], p_ref[...], preferred_element_type=jnp.float32)

    # Folded eval-BN bias + ReLU, stored lane-dense (no transpose).
    y = jnp.maximum(acc + b_ref[...], 0.0)
    o_ref[0, 0] = y.astype(o_ref.dtype)


def _pick_row_tile(h, w, cin_p, cout, itemsize, budget_bytes=8 << 20):
    """Largest divisor of H whose per-step blocks (double-buffered) fit the budget."""
    wp = w + 2
    best = 1
    for d in range(1, h + 1):
        if h % d:
            continue
        win = (d + 2) * wp + 2
        need = (2 * (cin_p * win + cout * d * wp)       # double-buffered in/out blocks
                + 9 * cin_p * d * wp) * itemsize        # im2col scratch
        if need <= budget_bytes:
            best = d
    return best


def const_block(x, conv_w, bn_gamma, bn_beta, bn_mean, bn_var, *, eps=1e-5,
                row_tile=None):
    """ConstBlock forward: 3x3 conv (pad=1, no bias) + BatchNorm(eval) + ReLU. NCHW."""
    B, cin, H, W = x.shape
    cout = conv_w.shape[0]
    wp = W + 2
    hp = H + 2
    itemsize = jnp.dtype(x.dtype).itemsize

    # Pad channels to a multiple of 8 (zero data + zero weight columns) so the im2col
    # scratch stores are sublane-aligned; no-op for realistic channel counts.
    cin_p = ((cin + 7) // 8) * 8

    if row_tile is None:
        row_tile = _pick_row_tile(H, W, cin_p, cout, itemsize)
    # Round down to a divisor of H.  TODO(synk): ragged row tiles are not supported.
    row_tile = max(d for d in range(1, min(row_tile, H) + 1) if H % d == 0)
    n_tiles = H // row_tile
    tile = row_tile * wp                   # output positions per step (padded-width grid)
    win = (row_tile + 2) * wp + 2          # halo'd flat input window per step

    # ---- Wrapper pre-pass: layout plumbing only (no transpose, no f32 upcast). ----
    # 1-px zero halo, flatten spatial onto the lane axis (channels stay off lanes),
    # +2 trailing zeros so the tap windows of the garbage halo columns stay in bounds,
    # then overlapping halo'd row-tile windows (only 2 halo rows duplicated per tile).
    xp = jnp.pad(x, ((0, 0), (0, cin_p - cin), (1, 1), (1, 1)))       # (B, cin_p, H+2, W+2)
    xf = jnp.pad(xp.reshape(B, cin_p, hp * wp), ((0, 0), (0, 0), (0, 2)))
    xwin = jnp.stack(
        [xf[:, :, r * row_tile * wp: r * row_tile * wp + win] for r in range(n_tiles)],
        axis=1)                                                       # (B, n_tiles, cin_p, win)

    # Fold eval-BN scale into the conv weights; only a bias remains for the kernel.
    # TODO(synk): training-mode BN (batch statistics) is not implemented; eval semantics.
    inv_std = (bn_gamma / jnp.sqrt(bn_var + eps)).astype(jnp.float32)
    w_scaled = conv_w.astype(jnp.float32) * inv_std[:, None, None, None]
    # (cout, cin, 3, 3) -> (cout, 3, 3, cin) -> pad cin -> (cout, 9*cin_p);
    # column k = (dy*3 + dx) * cin_p + c, matching the im2col row order in the kernel.
    w_mat = jnp.transpose(w_scaled, (0, 2, 3, 1))
    w_mat = jnp.pad(w_mat, ((0, 0), (0, 0), (0, 0), (0, cin_p - cin)))
    w_mat = w_mat.reshape(cout, 9 * cin_p).astype(x.dtype)
    bias = (bn_beta.astype(jnp.float32)
            - bn_mean.astype(jnp.float32) * inv_std).reshape(cout, 1)

    # Scoped-VMEM limit derived from the actual block sizes (v7x has only 64 MiB).
    block_bytes = (cin_p * win + cout * tile) * itemsize
    fixed_bytes = (cout * 9 * cin_p + 9 * cin_p * tile) * itemsize + cout * 4
    vmem_limit = int(min(64 << 20, max(4 << 20, 2 * block_bytes + fixed_bytes + (2 << 20))))

    kernel = functools.partial(_const_block_kernel, cin=cin_p, wp=wp, tile=tile)

    out = pl.pallas_call(
        kernel,
        out_shape=jax.ShapeDtypeStruct((B, n_tiles, cout, tile), x.dtype),
        grid=(B, n_tiles),
        in_specs=[
            pl.BlockSpec((1, 1, cin_p, win), lambda b, r: (b, r, 0, 0)),   # halo'd row tile
            pl.BlockSpec((cout, 9 * cin_p), lambda b, r: (0, 0)),          # BN-scaled fused taps
            pl.BlockSpec((cout, 1), lambda b, r: (0, 0)),                  # folded BN bias
        ],
        out_specs=pl.BlockSpec((1, 1, cout, tile), lambda b, r: (b, r, 0, 0)),
        scratch_shapes=[pltpu.VMEM((9 * cin_p, tile), x.dtype)],
        compiler_params=pltpu.CompilerParams(
            dimension_semantics=("parallel", "parallel"),
            vmem_limit_bytes=vmem_limit),
    )(xwin, w_mat, bias)

    # Wrapper post-pass: (B, n_tiles, cout, row_tile, Wp) -> (B, cout, H, Wp),
    # then drop the 2 garbage halo columns of each row.
    out = out.reshape(B, n_tiles, cout, row_tile, wp)
    out = jnp.transpose(out, (0, 2, 1, 3, 4)).reshape(B, cout, H, wp)
    return out[:, :, :, :W]


def const_block_ref(x, conv_w, bn_gamma, bn_beta, bn_mean, bn_var, *, eps=1e-5):
    """Pure-JAX reference (same math) for validation."""
    y = jax.lax.conv_general_dilated(
        x, conv_w, window_strides=(1, 1), padding=((1, 1), (1, 1)),
        dimension_numbers=('NCHW', 'OIHW', 'NCHW'),
        precision=jax.lax.Precision.HIGHEST)
    inv_std = bn_gamma / jnp.sqrt(bn_var + eps)
    s = inv_std[None, :, None, None]
    b = (bn_beta - bn_mean * inv_std)[None, :, None, None]
    return jnp.maximum(y * s + b, 0.0)


if __name__ == "__main__":
    B, Cin, Cout, H, W = 2, 4, 8, 16, 16

    key = jax.random.PRNGKey(0)
    k1, k2, k3, k4 = jax.random.split(key, 4)
    x = jax.random.normal(k1, (B, Cin, H, W), jnp.float32)
    conv_w = jax.random.normal(k2, (Cout, Cin, 3, 3), jnp.float32) * 0.1
    bn_gamma = 1.0 + 0.1 * jax.random.normal(k3, (Cout,), jnp.float32)
    bn_beta = 0.1 * jax.random.normal(k4, (Cout,), jnp.float32)
    bn_mean = jnp.zeros((Cout,), jnp.float32)   # PyTorch BN running stats at init
    bn_var = jnp.ones((Cout,), jnp.float32)

    ref = const_block_ref(x, conv_w, bn_gamma, bn_beta, bn_mean, bn_var)

    # Exercise both the explicit row-tiled path (2 spatial tiles) and the auto-tiled path.
    for rt in (8, None):
        out = jax.block_until_ready(
            const_block(x, conv_w, bn_gamma, bn_beta, bn_mean, bn_var, row_tile=rt))
        assert out.shape == (B, Cout, H, W), out.shape
        max_err = float(jnp.max(jnp.abs(out - ref)))
        assert max_err < 2e-3, f"mismatch vs reference (row_tile={rt}): {max_err}"

    print("KERNEL_OK")
</pallas_src>

<mosaic_0001>
module attributes {stable_mosaic.version = 11 : i64} {
  func.func @_const_block_kernel(%arg0: i32, %arg1: i32, %arg2: memref<1x1x8x182xf32, #tpu.memory_space<vmem>>, %arg3: memref<8x72xf32, #tpu.memory_space<vmem>>, %arg4: memref<8x1xf32, #tpu.memory_space<vmem>>, %arg5: memref<1x1x8x144xf32, #tpu.memory_space<vmem>>, %arg6: memref<72x144xf32, #tpu.memory_space<vmem>>) attributes {dimension_semantics = [#tpu.dimension_semantics<parallel>, #tpu.dimension_semantics<parallel>], iteration_bounds = array<i64: 2, 2>, scalar_prefetch = 0 : i64, scratch_operands = 1 : i64, tpu.core_type = #tpu.core_type<tc>, window_params = [{transform_indices = @transform_0, window_bounds = array<i64: 1, 1, 8, 182>}, {pipeline_mode = #tpu.pipeline_mode<synchronous>, transform_indices = @transform_1, window_bounds = array<i64: 8, 72>}, {pipeline_mode = #tpu.pipeline_mode<synchronous>, transform_indices = @transform_2, window_bounds = array<i64: 8, 1>}, {transform_indices = @transform_3, window_bounds = array<i64: 1, 1, 8, 144>}]} {
    %c0 = arith.constant 0 : index
    %c0_0 = arith.constant 0 : index
    %c0_1 = arith.constant 0 : index
    %c0_2 = arith.constant 0 : index
    %0 = vector.load %arg2[%c0, %c0_0, %c0_1, %c0_2] : memref<1x1x8x182xf32, #tpu.memory_space<vmem>>, vector<1x1x8x144xf32>
    %1 = vector.shape_cast %0 : vector<1x1x8x144xf32> to vector<8x144xf32>
    %c0_3 = arith.constant 0 : index
    %c0_4 = arith.constant 0 : index
    %2 = vector.load %arg6[%c0_3, %c0_4] : memref<72x144xf32, #tpu.memory_space<vmem>>, vector<8x144xf32>
    tpu.vector_store %arg6[%c0_3, %c0_4], %1 {strides = array<i32>} : memref<72x144xf32, #tpu.memory_space<vmem>>, vector<8x144xf32>,
    %c0_5 = arith.constant 0 : index
    %c0_6 = arith.constant 0 : index
    %c0_7 = arith.constant 0 : index
    %c1 = arith.constant 1 : index
    %3 = vector.load %arg2[%c0_5, %c0_6, %c0_7, %c1] : memref<1x1x8x182xf32, #tpu.memory_space<vmem>>, vector<1x1x8x144xf32>
    %4 = vector.shape_cast %3 : vector<1x1x8x144xf32> to vector<8x144xf32>
    %c8 = arith.constant 8 : index
    %c0_8 = arith.constant 0 : index
    %5 = vector.load %arg6[%c8, %c0_8] : memref<72x144xf32, #tpu.memory_space<vmem>>, vector<8x144xf32>
    tpu.vector_store %arg6[%c8, %c0_8], %4 {strides = array<i32>} : memref<72x144xf32, #tpu.memory_space<vmem>>, vector<8x144xf32>,
    %c0_9 = arith.constant 0 : index
    %c0_10 = arith.constant 0 : index
    %c0_11 = arith.constant 0 : index
    %c2 = arith.constant 2 : index
    %6 = vector.load %arg2[%c0_9, %c0_10, %c0_11, %c2] : memref<1x1x8x182xf32, #tpu.memory_space<vmem>>, vector<1x1x8x144xf32>
    %7 = vector.shape_cast %6 : vector<1x1x8x144xf32> to vector<8x144xf32>
    %c16 = arith.constant 16 : index
    %c0_12 = arith.constant 0 : index
    %8 = vector.load %arg6[%c16, %c0_12] : memref<72x144xf32, #tpu.memory_space<vmem>>, vector<8x144xf32>
    tpu.vector_store %arg6[%c16, %c0_12], %7 {strides = array<i32>} : memref<72x144xf32, #tpu.memory_space<vmem>>, vector<8x144xf32>,
    %c0_13 = arith.constant 0 : index
    %c0_14 = arith.constant 0 : index
    %c0_15 = arith.constant 0 : index
    %c18 = arith.constant 18 : index
    %9 = vector.load %arg2[%c0_13, %c0_14, %c0_15, %c18] : memref<1x1x8x182xf32, #tpu.memory_space<vmem>>, vector<1x1x8x144xf32>
    %10 = vector.shape_cast %9 : vector<1x1x8x144xf32> to vector<8x144xf32>
    %c24 = arith.constant 24 : index
    %c0_16 = arith.constant 0 : index
    %11 = vector.load %arg6[%c24, %c0_16] : memref<72x144xf32, #tpu.memory_space<vmem>>, vector<8x144xf32>
    tpu.vector_store %arg6[%c24, %c0_16], %10 {strides = array<i32>} : memref<72x144xf32, #tpu.memory_space<vmem>>, vector<8x144xf32>,
    %c0_17 = arith.constant 0 : index
    %c0_18 = arith.constant 0 : index
    %c0_19 = arith.constant 0 : index
    %c19 = arith.constant 19 : index
    %12 = vector.load %arg2[%c0_17, %c0_18, %c0_19, %c19] : memref<1x1x8x182xf32, #tpu.memory_space<vmem>>, vector<1x1x8x144xf32>
    %13 = vector.shape_cast %12 : vector<1x1x8x144xf32> to vector<8x144xf32>
    %c32 = arith.constant 32 : index
    %c0_20 = arith.constant 0 : index
    %14 = vector.load %arg6[%c32, %c0_20] : memref<72x144xf32, #tpu.memory_space<vmem>>, vector<8x144xf32>
    tpu.vector_store %arg6[%c32, %c0_20], %13 {strides = array<i32>} : memref<72x144xf32, #tpu.memory_space<vmem>>, vector<8x144xf32>,
    %c0_21 = arith.constant 0 : index
    %c0_22 = arith.constant 0 : index
    %c0_23 = arith.constant 0 : index
    %c20 = arith.constant 20 : index
    %15 = vector.load %arg2[%c0_21, %c0_22, %c0_23, %c20] : memref<1x1x8x182xf32, #tpu.memory_space<vmem>>, vector<1x1x8x144xf32>
    %16 = vector.shape_cast %15 : vector<1x1x8x144xf32> to vector<8x144xf32>
    %c40 = arith.constant 40 : index
    %c0_24 = arith.constant 0 : index
    %17 = vector.load %arg6[%c40, %c0_24] : memref<72x144xf32, #tpu.memory_space<vmem>>, vector<8x144xf32>
    tpu.vector_store %arg6[%c40, %c0_24], %16 {strides = array<i32>} : memref<72x144xf32, #tpu.memory_space<vmem>>, vector<8x144xf32>,
    %c0_25 = arith.constant 0 : index
    %c0_26 = arith.constant 0 : index
    %c0_27 = arith.constant 0 : index
    %c36 = arith.constant 36 : index
    %18 = vector.load %arg2[%c0_25, %c0_26, %c0_27, %c36] : memref<1x1x8x182xf32, #tpu.memory_space<vmem>>, vector<1x1x8x144xf32>
    %19 = vector.shape_cast %18 : vector<1x1x8x144xf32> to vector<8x144xf32>
    %c48 = arith.constant 48 : index
    %c0_28 = arith.constant 0 : index
    %20 = vector.load %arg6[%c48, %c0_28] : memref<72x144xf32, #tpu.memory_space<vmem>>, vector<8x144xf32>
    tpu.vector_store %arg6[%c48, %c0_28], %19 {strides = array<i32>} : memref<72x144xf32, #tpu.memory_space<vmem>>, vector<8x144xf32>,
    %c0_29 = arith.constant 0 : index
    %c0_30 = arith.constant 0 : index
    %c0_31 = arith.constant 0 : index
    %c37 = arith.constant 37 : index
    %21 = vector.load %arg2[%c0_29, %c0_30, %c0_31, %c37] : memref<1x1x8x182xf32, #tpu.memory_space<vmem>>, vector<1x1x8x144xf32>
    %22 = vector.shape_cast %21 : vector<1x1x8x144xf32> to vector<8x144xf32>
    %c56 = arith.constant 56 : index
    %c0_32 = arith.constant 0 : index
    %23 = vector.load %arg6[%c56, %c0_32] : memref<72x144xf32, #tpu.memory_space<vmem>>, vector<8x144xf32>
    tpu.vector_store %arg6[%c56, %c0_32], %22 {strides = array<i32>} : memref<72x144xf32, #tpu.memory_space<vmem>>, vector<8x144xf32>,
    %c0_33 = arith.constant 0 : index
    %c0_34 = arith.constant 0 : index
    %c0_35 = arith.constant 0 : index
    %c38 = arith.constant 38 : index
    %24 = vector.load %arg2[%c0_33, %c0_34, %c0_35, %c38] : memref<1x1x8x182xf32, #tpu.memory_space<vmem>>, vector<1x1x8x144xf32>
    %25 = vector.shape_cast %24 : vector<1x1x8x144xf32> to vector<8x144xf32>
    %c64 = arith.constant 64 : index
    %c0_36 = arith.constant 0 : index
    %26 = vector.load %arg6[%c64, %c0_36] : memref<72x144xf32, #tpu.memory_space<vmem>>, vector<8x144xf32>
    tpu.vector_store %arg6[%c64, %c0_36], %25 {strides = array<i32>} : memref<72x144xf32, #tpu.memory_space<vmem>>, vector<8x144xf32>,
    %c0_37 = arith.constant 0 : index
    %c0_38 = arith.constant 0 : index
    %27 = vector.load %arg3[%c0_37, %c0_38] : memref<8x72xf32, #tpu.memory_space<vmem>>, vector<8x72xf32>
    %c0_39 = arith.constant 0 : index
    %c0_40 = arith.constant 0 : index
    %28 = vector.load %arg6[%c0_39, %c0_40] : memref<72x144xf32, #tpu.memory_space<vmem>>, vector<72x144xf32>
    %cst = arith.constant dense<0.000000e+00> : vector<8x144xf32>
    %29 = tpu.matmul %27, %28, %cst {dimension_numbers = #tpu.dot_dimension_numbers<[1], [0], [0], [1], [0, 0, 1, 1], [], []>} : vector<8x72xf32>, vector<72x144xf32>, vector<8x144xf32> -> vector<8x144xf32>
    %c0_41 = arith.constant 0 : index
    %c0_42 = arith.constant 0 : index
    %30 = vector.load %arg4[%c0_41, %c0_42] : memref<8x1xf32, #tpu.memory_space<vmem>>, vector<8x1xf32>
    %31 = vector.broadcast %30 : vector<8x1xf32> to vector<8x144xf32>
    %32 = arith.addf %29, %31 : vector<8x144xf32>
    %cst_43 = arith.constant 0.000000e+00 : f32
    %33 = vector.broadcast %cst_43 : f32 to vector<8x144xf32>
    %34 = arith.maximumf %32, %33 : vector<8x144xf32>
    %c0_44 = arith.constant 0 : index
    %c0_45 = arith.constant 0 : index
    %c0_46 = arith.constant 0 : index
    %c0_47 = arith.constant 0 : index
    %35 = vector.load %arg5[%c0_44, %c0_45, %c0_46, %c0_47] : memref<1x1x8x144xf32, #tpu.memory_space<vmem>>, vector<1x1x8x144xf32>
    %36 = vector.shape_cast %35 : vector<1x1x8x144xf32> to vector<8x144xf32>
    %37 = vector.shape_cast %34 : vector<8x144xf32> to vector<1x1x8x144xf32>
    tpu.vector_store %arg5[%c0_44, %c0_45, %c0_46, %c0_47], %37 {strides = array<i32>} : memref<1x1x8x144xf32, #tpu.memory_space<vmem>>, vector<1x1x8x144xf32>,
    return
  }
  func.func @transform_0(%arg0: i32, %arg1: i32) -> (i32, i32, i32, i32) {
    %c0_i32 = arith.constant 0 : i32
    %c0_i32_0 = arith.constant 0 : i32
    %c0_i32_1 = arith.constant 0 : i32
    return %arg0, %arg1, %c0_i32, %c0_i32_0 : i32, i32, i32, i32
  }
  func.func @transform_1(%arg0: i32, %arg1: i32) -> (i32, i32) {
    %c0_i32 = arith.constant 0 : i32
    %c0_i32_0 = arith.constant 0 : i32
    %c0_i32_1 = arith.constant 0 : i32
    return %c0_i32, %c0_i32_0 : i32, i32
  }
  func.func @transform_2(%arg0: i32, %arg1: i32) -> (i32, i32) {
    %c0_i32 = arith.constant 0 : i32
    %c0_i32_0 = arith.constant 0 : i32
    %c0_i32_1 = arith.constant 0 : i32
    return %c0_i32, %c0_i32_0 : i32, i32
  }
  func.func @transform_3(%arg0: i32, %arg1: i32) -> (i32, i32, i32, i32) {
    %c0_i32 = arith.constant 0 : i32
    %c0_i32_0 = arith.constant 0 : i32
    %c0_i32_1 = arith.constant 0 : i32
    return %arg0, %arg1, %c0_i32, %c0_i32_0 : i32, i32, i32, i32
  }
}

</mosaic_0001>

<llo_original>
// kernel: tpu_custom_call.1
$region0: #{tpu_custom_call.1}
  #allocation0 [shape = 'u32[]', space=smem, size = 0x4, offset = 0x4, fixed_abs, tag = 'smem constant byte address 0x4 - core index']
  #allocation1 [shape = 'u32[72,128]{1,0:T(1,128)}', space=vmem, size = 0x9000, scoped, tag = 'internal scratch']
  #allocation2 [shape = 'f32[72,144]{1,0:T(8,128)}', space=vmem, size = 0x12000, scoped, tag = 'scratch operand']
  %s0 = inlined_call_operand.hbm [shape: f32[2,2,8,182], index: 0, kind: input, shape index: {}]
  %s1 = inlined_call_operand.vmem [shape: f32[8,72], index: 1, kind: input, shape index: {}]
  %s2 = inlined_call_operand.vmem [shape: f32[8,1], index: 2, kind: input, shape index: {}]
  %s3 = inlined_call_operand.hbm [shape: f32[2,2,8,144], index: 3, kind: output, shape index: {}]
  %s4 = sld [smem:[#allocation0]]
  $region49: #{tpu_custom_call.1} parent=0
    _
  %s6 = ssub.s32 1, %s4
  %s7 = scalar_select 0, %s6, %s4
  $region1: #{tpu_custom_call.1} parent=0
    #allocation3 [shape = 'u8[16384]{0}', space=vmem, size = 0x4000, scoped, tag = 'input window, operand 0']
    #allocation4 [shape = 's32[2]{0}', space=sflag, size = 0x8, scoped, tag = 'scoped memory for tpu_custom_call.1']
    #allocation5 [shape = 's32[2]{0}', space=sflag, size = 0x8, scoped, tag = 'scoped memory for tpu_custom_call.1']
    #allocation6 [shape = 'u8[16384]{0}', space=vmem, size = 0x4000, scoped, tag = 'output window, operand 0']
    %8 = vsyncpa [#allocation4], 0
    %s9 = scalar_lea.sflag [#allocation4], 1
    %10 = vsyncpa %s9, 0
    %11 = vsyncpa [#allocation5], 0
    %s12 = scalar_lea.sflag [#allocation5], 1
    %13 = vsyncpa %s12, 0
    loop: start=0, step=1, limit=6
    $region2: #{tpu_custom_call.1} parent=1 // loop_pre_header
      _
    $region3: #{tpu_custom_call.1} parent=1 // loop_header
      %s15 = sphi 0, %s19
      %p16 = scmp.ge.s32.totalorder %s15, 6
      %s22 = sphi 0, %s34
      %s23 = sphi 0, %s30
      %s24 = sphi 0, %s22
      %s25 = sphi 0, %s23
      %s26 = sphi 0, %s24
      %s27 = sphi 0, %s25
      %s39 = sphi 0, %s41
      %s42 = sphi 0, %s39
      %s43 = sphi 0, %s42
      %s59 = sphi 0, %s43
      %s63 = sphi 0, %s63
      %s65 = sphi 0, %s63
      %s66 = sphi 0, %s65
      %s80 = sphi 0, %s66
      %s84 = sphi 0, %s84
      %s86 = sphi 0, %s84
      %s87 = sphi 0, %s86
      %s101 = sphi 0, %s87
      %s109 = sphi 0, %s111
      %s112 = sphi 0, %s109
      %s113 = sphi 0, %s112
      %s129 = sphi 0, %s113
    $region4: #{tpu_custom_call.1} parent=1 // loop_header_branch
      %18 = sbr.rel (%p16) target = $region8
    $region5: #{tpu_custom_call.1} parent=1 // loop_body
      %s20 = ssub.s32 %s15, 1
      %s21 = ssub.s32 %s15, 2
      %s28 = sadd.s32 1, %s23
      %p29 = scmp.ge.s32.totalorder %s28, 2
      %s30 = scalar_select %p29, 0, %s28
      %s31 = sadd.s32 1, %s22
      %s32 = scalar_select %p29, %s31, %s22
      %p33 = scmp.ge.s32.totalorder %s32, 2
      %s34 = scalar_select %p33, 0, %s32
      %s35 = ssub.s32 %s22, %s34
      %s36 = ssub.s32 %s23, %s30
      %s37 = sor.u32 %s35, %s36
      %p38 = scmp.eq.s32.totalorder %s37, 0
      %s40 = sadd.s32 %s39, 1
      %s41 = scalar_select %p38, %s39, %s40
      %p44 = pneg %p38
      %p45 = scmp.eq.s32.totalorder %s15, 3
      %p46 = por %p44, %p45
      %p47 = scmp.ne.s32.totalorder %s39, %s42
      %p48 = scmp.eq.s32.totalorder %s15, 0
      %p49 = por %p47, %p48
      %p50 = scmp.ne.s32.totalorder %s39, %s42
      %p51 = scmp.eq.s32.totalorder %s20, 3
      %p52 = por %p50, %p51
      %p53 = scmp.ne.s32.totalorder %s42, %s43
      %p54 = scmp.eq.s32.totalorder %s20, 0
      %p55 = por %p53, %p54
      %p56 = scmp.ne.s32.totalorder %s42, %s43
      %p57 = scmp.eq.s32.totalorder %s21, 3
      %p58 = por %p56, %p57
      %p60 = scmp.ne.s32.totalorder %s43, %s59
      %p61 = scmp.eq.s32.totalorder %s21, 0
      %p62 = por %p60, %p61
      %s64 = sadd.s32 %s63, 1
      %p67 = scmp.eq.s32.totalorder %s15, 3
      %p68 = scmp.ne.s32.totalorder %s63, %s65
      %p69 = scmp.eq.s32.totalorder %s15, 0
      %p70 = por %p68, %p69
      %p71 = scmp.ne.s32.totalorder %s63, %s65
      %p72 = scmp.eq.s32.totalorder %s20, 3
      %p73 = por %p71, %p72
      %p74 = scmp.ne.s32.totalorder %s65, %s66
      %p75 = scmp.eq.s32.totalorder %s20, 0
      %p76 = por %p74, %p75
      %p77 = scmp.ne.s32.totalorder %s65, %s66
      %p78 = scmp.eq.s32.totalorder %s21, 3
      %p79 = por %p77, %p78
      %p81 = scmp.ne.s32.totalorder %s66, %s80
      %p82 = scmp.eq.s32.totalorder %s21, 0
      %p83 = por %p81, %p82
      %s85 = sadd.s32 %s84, 1
      %p88 = scmp.eq.s32.totalorder %s15, 3
      %p89 = scmp.ne.s32.totalorder %s84, %s86
      %p90 = scmp.eq.s32.totalorder %s15, 0
      %p91 = por %p89, %p90
      %p92 = scmp.ne.s32.totalorder %s84, %s86
      %p93 = scmp.eq.s32.totalorder %s20, 3
      %p94 = por %p92, %p93
      %p95 = scmp.ne.s32.totalorder %s86, %s87
      %p96 = scmp.eq.s32.totalorder %s20, 0
      %p97 = por %p95, %p96
      %p98 = scmp.ne.s32.totalorder %s86, %s87
      %p99 = scmp.eq.s32.totalorder %s21, 3
      %p100 = por %p98, %p99
      %p102 = scmp.ne.s32.totalorder %s87, %s101
      %p103 = scmp.eq.s32.totalorder %s21, 0
      %p104 = por %p102, %p103
      %s105 = ssub.s32 %s22, %s34
      %s106 = ssub.s32 %s23, %s30
      %s107 = sor.u32 %s105, %s106
      %p108 = scmp.eq.s32.totalorder %s107, 0
      %s110 = sadd.s32 %s109, 1
      %s111 = scalar_select %p108, %s109, %s110
      %p114 = pneg %p108
      %p115 = scmp.eq.s32.totalorder %s15, 3
      %p116 = por %p114, %p115
      %p117 = scmp.ne.s32.totalorder %s109, %s112
      %p118 = scmp.eq.s32.totalorder %s15, 0
      %p119 = por %p117, %p118
      %p120 = scmp.ne.s32.totalorder %s109, %s112
      %p121 = scmp.eq.s32.totalorder %s20, 3
      %p122 = por %p120, %p121
      %p123 = scmp.ne.s32.totalorder %s112, %s113
      %p124 = scmp.eq.s32.totalorder %s20, 0
      %p125 = por %p123, %p124
      %p126 = scmp.ne.s32.totalorder %s112, %s113
      %p127 = scmp.eq.s32.totalorder %s21, 3
      %p128 = por %p126, %p127
      %p130 = scmp.ne.s32.totalorder %s113, %s129
      %p131 = scmp.eq.s32.totalorder %s21, 0
      %p132 = por %p130, %p131
      %p133 = scmp.le.s32.totalorder 1, %s15
      %p134 = scmp.lt.s32.totalorder %s15, 5
      %p135 = pnand %p133, %p134
      %p136 = pneg %p135
      // Predicated region
      $region9: #{tpu_custom_call.1} parent=5 // pred_check
        _
      $region10: #{tpu_custom_call.1} parent=5 // pred_check_branch
        %138 = sbr.rel (%p135) target = $region12
      $region11: #{tpu_custom_call.1} parent=5 // pred_region
        %s139 = ssub.s32 %s15, 1
        // Predicated region
        $region13: #{tpu_custom_call.1} parent=11 // pred_check
          %p140 = pneg %p76
        $region14: #{tpu_custom_call.1} parent=11 // pred_check_branch
          %142 = sbr.rel (%p140) target = $region16
        $region15: #{tpu_custom_call.1} parent=11 // pred_region
          _
        $region16: #{tpu_custom_call.1} parent=11 // pred_fallthru
          _
        // Predicated region
        $region17: #{tpu_custom_call.1} parent=11 // pred_check
          %p143 = pneg %p97
        $region18: #{tpu_custom_call.1} parent=11 // pred_check_branch
          %145 = sbr.rel (%p143) target = $region20
        $region19: #{tpu_custom_call.1} parent=11 // pred_region
          _
        $region20: #{tpu_custom_call.1} parent=11 // pred_fallthru
          _
      $region12: #{tpu_custom_call.1} parent=5 // pred_fallthru
        _
      %p146 = scmp.lt.s32.totalorder %s15, 4
      // Predicated region
      $region21: #{tpu_custom_call.1} parent=5 // pred_check
        %p147 = pneg %p146
      $region22: #{tpu_custom_call.1} parent=5 // pred_check_branch
        %149 = sbr.rel (%p147) target = $region24
      $region23: #{tpu_custom_call.1} parent=5 // pred_region
        // Predicated region
        $region25: #{tpu_custom_call.1} parent=23 // pred_check
          %p150 = pneg %p49
        $region26: #{tpu_custom_call.1} parent=23 // pred_check_branch
          %152 = sbr.rel (%p150) target = $region28
        $region27: #{tpu_custom_call.1} parent=23 // pred_region
          %s153 = sand.u32 %s39, 1
          %s154 = scalar_lea.sflag [#allocation4], %s153
          %s155 = sand.u32 %s39, 1
          %s156 = smul.addr %s155, 16
          %s157 = scalar_lea.vmem [#allocation3], %s156
          %159 = vsyncadd %s154, 0
          %s160 = smul.addr %s23, 2
          %s161 = smul.addr %s22, 4
          %s162 = sadd.s32 %s160, %s161
          %s163 = smul.addr %s162, 8
          %s164 = scalar_lea.hbm %s0, %s163
          %s166 = sshll.u32 %s164, 4
          %s167 = int_to_ptr.hbm [resolvable:$true] %s166
          %s168 = sshll.u32 %s157, 4
          %s169 = int_to_ptr.vmem [resolvable:$true] %s168
          %171 = dma.hbm_to_vmem [thread:$0]  %s167, 256, %s169, %s154
        $region28: #{tpu_custom_call.1} parent=23 // pred_fallthru
          _
      $region24: #{tpu_custom_call.1} parent=5 // pred_fallthru
        _
      %p172 = scmp.le.s32.totalorder 1, %s15
      %p173 = scmp.lt.s32.totalorder %s15, 5
      %p174 = pnand %p172, %p173
      %p175 = pneg %p174
      // Predicated region
      $region29: #{tpu_custom_call.1} parent=5 // pred_check
        _
      $region30: #{tpu_custom_call.1} parent=5 // pred_check_branch
        %177 = sbr.rel (%p174) target = $region32
      $region31: #{tpu_custom_call.1} parent=5 // pred_region
        %s178 = ssub.s32 %s15, 1
        %s179 = sand.u32 %s42, 1
        %s180 = scalar_lea.sflag [#allocation4], %s179
        %s181 = sand.u32 %s42, 1
        %s182 = smul.addr %s181, 16
        %s183 = scalar_lea.vmem [#allocation3], %s182
        // Predicated region
        $region33: #{tpu_custom_call.1} parent=31 // pred_check
          %p184 = pneg %p55
        $region34: #{tpu_custom_call.1} parent=31 // pred_check_branch
          %186 = sbr.rel (%p184) target = $region36
        $region35: #{tpu_custom_call.1} parent=31 // pred_region
          %188 = dma.done %s180, 256
        $region36: #{tpu_custom_call.1} parent=31 // pred_fallthru
          _
        %s189 = sand.u32 %s42, 1
        %s190 = scalar_lea.sflag [#allocation4], %s189
        %s191 = sand.u32 %s42, 1
        %s192 = smul.addr %s191, 16
        %s193 = scalar_lea.vmem [#allocation3], %s192
        %p194 = pneg %p55
        %p195 = pneg %p52
        %p196 = pneg %p76
        %p197 = pneg %p73
        %p198 = pneg %p97
        %p199 = pneg %p94
        %p200 = pneg %p125
        %p201 = pneg %p122
        %s202 = sand.u32 %s112, 1
        %s203 = scalar_lea.sflag [#allocation5], %s202
        %s204 = sand.u32 %s112, 1
        %s205 = smul.addr %s204, 16
        %s206 = scalar_lea.vmem [#allocation6], %s205
        %v207 = vld [vmem:[%s183] sm:$0xff]
        %v208 = vld [vmem:[%s183 + $0x8] sm:$0xff]
        %209 = vst [vmem:[#allocation2] sm:$0xff] %v207
        %vm210 = vcmask 130048
        %211 = vst.msk [vmem:[#allocation2 + $0x8] sm:$0xff] %vm210, %v208
        %v212 = vld [vmem:[%s183] sm:$0xff]
        %v213 = vld [vmem:[%s183 + $0x8] sm:$0xff]
        %216 = vrot.lane.b32.xlu0 %v212, 127
        %v217 = vpop.permute.xlu0 %216
        %218 = vrot.lane.b32.xlu0 %v213, 127
        %v219 = vpop.permute.xlu0 %218
        %vm220 = vcmask 1039360
        %v221 = vsel %vm220, %v217, %v219
        %224 = vst [vmem:[#allocation2 + $0x10] sm:$0xff] %v221
        %225 = vst.msk [vmem:[#allocation2 + $0x18] sm:$0xff] %vm210, %v219
        %v226 = vld [vmem:[%s183] sm:$0xff]
        %v227 = vld [vmem:[%s183 + $0x8] sm:$0xff]
        %230 = vrot.lane.b32.xlu0 %v226, 126
        %v231 = vpop.permute.xlu0 %230
        %232 = vrot.lane.b32.xlu0 %v227, 126
        %v233 = vpop.permute.xlu0 %232
        %vm234 = vcmask 1031168
        %v235 = vsel %vm234, %v231, %v233
        %238 = vst [vmem:[#allocation2 + $0x20] sm:$0xff] %v235
        %239 = vst.msk [vmem:[#allocation2 + $0x28] sm:$0xff] %vm210, %v233
        %v240 = vld [vmem:[%s183] sm:$0xff]
        %v241 = vld [vmem:[%s183 + $0x8] sm:$0xff]
        %244 = vrot.lane.b32.xlu0 %v240, 110
        %v245 = vpop.permute.xlu0 %244
        %246 = vrot.lane.b32.xlu0 %v241, 110
        %v247 = vpop.permute.xlu0 %246
        %vm248 = vcmask 900096
        %v249 = vsel %vm248, %v245, %v247
        %252 = vst [vmem:[#allocation2 + $0x30] sm:$0xff] %v249
        %253 = vst.msk [vmem:[#allocation2 + $0x38] sm:$0xff] %vm210, %v247
        %v254 = vld [vmem:[%s183] sm:$0xff]
        %v255 = vld [vmem:[%s183 + $0x8] sm:$0xff]
        %258 = vrot.lane.b32.xlu0 %v254, 109
        %v259 = vpop.permute.xlu0 %258
        %260 = vrot.lane.b32.xlu0 %v255, 109
        %v261 = vpop.permute.xlu0 %260
        %vm262 = vcmask 891904
        %v263 = vsel %vm262, %v259, %v261
        %266 = vst [vmem:[#allocation2 + $0x40] sm:$0xff] %v263
        %267 = vst.msk [vmem:[#allocation2 + $0x48] sm:$0xff] %vm210, %v261
        %v268 = vld [vmem:[%s183] sm:$0xff]
        %v269 = vld [vmem:[%s183 + $0x8] sm:$0xff]
        %272 = vrot.lane.b32.xlu0 %v268, 108
        %v273 = vpop.permute.xlu0 %272
        %274 = vrot.lane.b32.xlu0 %v269, 108
        %v275 = vpop.permute.xlu0 %274
        %vm276 = vcmask 883712
        %v277 = vsel %vm276, %v273, %v275
        %280 = vst [vmem:[#allocation2 + $0x50] sm:$0xff] %v277
        %281 = vst.msk [vmem:[#allocation2 + $0x58] sm:$0xff] %vm210, %v275
        %v282 = vld [vmem:[%s183] sm:$0xff]
        %v283 = vld [vmem:[%s183 + $0x8] sm:$0xff]
        %286 = vrot.lane.b32.xlu0 %v282, 92
        %v287 = vpop.permute.xlu0 %286
        %288 = vrot.lane.b32.xlu0 %v283, 92
        %v289 = vpop.permute.xlu0 %288
        %vm290 = vcmask 752640
        %v291 = vsel %vm290, %v287, %v289
        %294 = vst [vmem:[#allocation2 + $0x60] sm:$0xff] %v291
        %295 = vst.msk [vmem:[#allocation2 + $0x68] sm:$0xff] %vm210, %v289
        %v296 = vld [vmem:[%s183] sm:$0xff]
        %v297 = vld [vmem:[%s183 + $0x8] sm:$0xff]
        %300 = vrot.lane.b32.xlu0 %v296, 91
        %v301 = vpop.permute.xlu0 %300
        %302 = vrot.lane.b32.xlu0 %v297, 91
        %v303 = vpop.permute.xlu0 %302
        %vm304 = vcmask 744448
        %v305 = vsel %vm304, %v301, %v303
        %308 = vst [vmem:[#allocation2 + $0x70] sm:$0xff] %v305
        %309 = vst.msk [vmem:[#allocation2 + $0x78] sm:$0xff] %vm210, %v303
        %v310 = vld [vmem:[%s183] sm:$0xff]
        %v311 = vld [vmem:[%s183 + $0x8] sm:$0xff]
        %314 = vrot.lane.b32.xlu0 %v310, 90
        %v315 = vpop.permute.xlu0 %314
        %316 = vrot.lane.b32.xlu0 %v311, 90
        %v317 = vpop.permute.xlu0 %316
        %vm318 = vcmask 736256
        %v319 = vsel %vm318, %v315, %v317
        %322 = vst [vmem:[#allocation2 + $0x80] sm:$0xff] %v319
        %323 = vst.msk [vmem:[#allocation2 + $0x88] sm:$0xff] %vm210, %v317
        %v324 = vld [vmem:[%s1] sm:$0xff]
        %v325 = vld [vmem:[#allocation2] sm:$0xff]
        %v326 = vld [vmem:[#allocation2 + $0x8] sm:$0xff]
        %v327 = vld [vmem:[#allocation2 + $0x10] sm:$0xff]
        %v328 = vld [vmem:[#allocation2 + $0x18] sm:$0xff]
        %v329 = vld [vmem:[#allocation2 + $0x20] sm:$0xff]
        %v330 = vld [vmem:[#allocation2 + $0x28] sm:$0xff]
        %v331 = vld [vmem:[#allocation2 + $0x30] sm:$0xff]
        %v332 = vld [vmem:[#allocation2 + $0x38] sm:$0xff]
        %v333 = vld [vmem:[#allocation2 + $0x40] sm:$0xff]
        %v334 = vld [vmem:[#allocation2 + $0x48] sm:$0xff]
        %v335 = vld [vmem:[#allocation2 + $0x50] sm:$0xff]
        %v336 = vld [vmem:[#allocation2 + $0x58] sm:$0xff]
        %v337 = vld [vmem:[#allocation2 + $0x60] sm:$0xff]
        %v338 = vld [vmem:[#allocation2 + $0x68] sm:$0xff]
        %v339 = vld [vmem:[#allocation2 + $0x70] sm:$0xff]
        %v340 = vld [vmem:[#allocation2 + $0x78] sm:$0xff]
        %v341 = vld [vmem:[#allocation2 + $0x80] sm:$0xff]
        %v342 = vld [vmem:[#allocation2 + $0x88] sm:$0xff]
        %v343 = vld [vmem:[%s2] sm:$0xff]
        %345 = vset.pattern.permute.xlu0 0
        %346 = vperm.xlu0 %345, %v343
        %v347 = vpop.permute.xlu0 %346
        %vm349 = vcmask 588800
        %v351 = vsel %vm349, %v324, 0
        %353 = vmatpush.msra.mxu0 0.0
        %354 = vmatpush.msra.mxu0 0.0
        %355 = vmatpush.msra.mxu0 0.0
        %356 = vmatpush.msra.mxu0 0.0
        %357 = vmatpush.msra.mxu0 0.0
        %358 = vmatpush.msra.mxu0 0.0
        %359 = vmatpush.msra.mxu0 0.0
        %360 = vmatpush.msra.mxu0 %v341
        %361 = vmatpush.msra.mxu0 %v339
        %362 = vmatpush.msra.mxu0 %v337
        %363 = vmatpush.msra.mxu0 %v335
        %364 = vmatpush.msra.mxu0 %v333
        %365 = vmatpush.msra.mxu0 %v331
        %366 = vmatpush.msra.mxu0 %v329
        %367 = vmatpush.msra.mxu0 %v327
        %368 = vmatpush.msra.mxu0 %v325
        %369 = vmatmul.f32.gmra.mxu0 %v351
        %v370 = vpop.f32.mrf.mxu0
        %v371 = vadd.f32 %v347, %v370
        %372 = vdwg.mxu0
        %373 = vmatpush.msra.mxu0 0.0
        %374 = vmatpush.msra.mxu0 0.0
        %375 = vmatpush.msra.mxu0 0.0
        %376 = vmatpush.msra.mxu0 0.0
        %377 = vmatpush.msra.mxu0 0.0
        %378 = vmatpush.msra.mxu0 0.0
        %379 = vmatpush.msra.mxu0 0.0
        %380 = vmatpush.msra.mxu0 %v342
        %381 = vmatpush.msra.mxu0 %v340
        %382 = vmatpush.msra.mxu0 %v338
        %383 = vmatpush.msra.mxu0 %v336
        %384 = vmatpush.msra.mxu0 %v334
        %385 = vmatpush.msra.mxu0 %v332
        %386 = vmatpush.msra.mxu0 %v330
        %387 = vmatpush.msra.mxu0 %v328
        %388 = vmatpush.msra.mxu0 %v326
        %389 = vmatmul.f32.gmra.mxu0 %v351
        %v390 = vpop.f32.mrf.mxu0
        %v391 = vadd.f32 %v347, %v390
        %392 = vdwg.mxu0
        %v393 = vmax.f32 %v371, 0.0
        %v394 = vmax.f32 %v391, 0.0
        %395 = vst [vmem:[%s206] sm:$0xff] %v393
        %396 = vst.msk [vmem:[%s206 + $0x8] sm:$0xff] %vm210, %v394
        %s397 = sand.u32 %s112, 1
        %s398 = scalar_lea.sflag [#allocation5], %s397
        %s399 = sand.u32 %s112, 1
        %s400 = smul.addr %s399, 16
        %s401 = scalar_lea.vmem [#allocation6], %s400
        // Predicated region
        $region37: #{tpu_custom_call.1} parent=31 // pred_check
          %p402 = pneg %p122
        $region38: #{tpu_custom_call.1} parent=31 // pred_check_branch
          %404 = sbr.rel (%p402) target = $region40
        $region39: #{tpu_custom_call.1} parent=31 // pred_region
          %406 = vsyncadd %s398, 0
          %s407 = smul.addr %s25, 2
          %s408 = smul.addr %s24, 4
          %s409 = sadd.s32 %s407, %s408
          %s410 = smul.addr %s409, 8
          %s411 = scalar_lea.hbm %s3, %s410
          %s413 = sshll.u32 %s401, 4
          %s414 = int_to_ptr.vmem [resolvable:$true] %s413
          %s415 = sshll.u32 %s411, 4
          %s416 = int_to_ptr.hbm [resolvable:$true] %s415
          %418 = dma.vmem_to_hbm [thread:$0]  %s414, 256, %s416, %s398
        $region40: #{tpu_custom_call.1} parent=31 // pred_fallthru
          _
      $region32: #{tpu_custom_call.1} parent=5 // pred_fallthru
        _
      %p419 = scmp.le.s32.totalorder 2, %s15
      // Predicated region
      $region41: #{tpu_custom_call.1} parent=5 // pred_check
        %p420 = pneg %p419
      $region42: #{tpu_custom_call.1} parent=5 // pred_check_branch
        %422 = sbr.rel (%p420) target = $region44
      $region43: #{tpu_custom_call.1} parent=5 // pred_region
        %s423 = ssub.s32 %s15, 2
        // Predicated region
        $region45: #{tpu_custom_call.1} parent=43 // pred_check
          %p424 = pneg %p128
        $region46: #{tpu_custom_call.1} parent=43 // pred_check_branch
          %426 = sbr.rel (%p424) target = $region48
        $region47: #{tpu_custom_call.1} parent=43 // pred_region
          %s427 = sand.u32 %s113, 1
          %s428 = scalar_lea.sflag [#allocation5], %s427
          %s429 = sand.u32 %s113, 1
          %s430 = smul.addr %s429, 16
          %s431 = scalar_lea.vmem [#allocation6], %s430
          %433 = dma.done %s428, 256
        $region48: #{tpu_custom_call.1} parent=43 // pred_fallthru
          _
      $region44: #{tpu_custom_call.1} parent=5 // pred_fallthru
        _
    $region6: #{tpu_custom_call.1} parent=1 // loop_footer
      %s19 = sadd.s32 1, %s15
    $region7: #{tpu_custom_call.1} parent=1 // loop_footer_branch
      %14 = sbr.rel target = $region3
    $region8: #{tpu_custom_call.1} parent=1 // loop_exit
      _
    %434 = vsyncpa [#allocation4], 1
    %s435 = scalar_lea.sflag [#allocation4], 1
    %436 = vsyncpa %s435, 1
    %437 = vsyncpa [#allocation5], 1
    %s438 = scalar_lea.sflag [#allocation5], 1
    %439 = vsyncpa %s438, 1

</llo_original>
